<compile_context>
chip_gen: v6e
topology: v6e:2x2x1
jax: 0.10.0
libtpu: 0.0.40
codegen_flags: <defaults>
</compile_context>

<pallas_src>
import functools

import jax
import jax.numpy as jnp
from jax.experimental import pallas as pl
from jax.experimental.pallas import tpu as pltpu


EPS = 1e-5          # nn.BatchNorm1d default eps
NEG_SLOPE = 0.01    # nn.LeakyReLU default negative_slope
HIDDEN = 64


def _offsets(op_dim, pl_dim, hidden):
    """Static row offsets into the single packed (ROWS, hidden) parameter array."""
    w1_rows = op_dim + pl_dim + 1
    w1_pad = ((w1_rows + 7) // 8) * 8
    w2 = w1_pad
    w3 = w2 + hidden
    wo = w3 + hidden
    bn = wo + hidden
    bo = bn + 6
    rows = ((bo + 1 + 7) // 8) * 8
    return dict(w2=w2, w3=w3, wo=wo, bn=bn, bo=bo, rows=rows)


def _plant_kernel(op_dim, pl_dim, hidden, off,
                  pd_ref, op_ref, plv_ref, p_ref, out_ref):
    """PlantModelDay forward for ONE scenario-batch; all params resident in VMEM."""
    pd = pd_ref[...]      # (B, 1)
    op = op_ref[...]      # (B, OP)
    plv = plv_ref[...]    # (B, PL)   ("pl" input of the module; residual target)

    bn0 = off["bn"]

    def bn_lrelu(z, layer):
        # Train-mode BatchNorm1d (biased batch variance, two-pass), folded into
        # one FMA, then LeakyReLU as a single max (valid since 0 < slope < 1).
        g = p_ref[bn0 + 2 * layer: bn0 + 2 * layer + 1, :]
        be = p_ref[bn0 + 2 * layer + 1: bn0 + 2 * layer + 2, :]
        mean = jnp.mean(z, axis=0, keepdims=True)
        d = z - mean
        var = jnp.mean(d * d, axis=0, keepdims=True)
        s = g * jax.lax.rsqrt(var + EPS)          # (1, H)
        t = be - mean * s                          # (1, H)
        zn = z * s + t
        return jnp.maximum(zn, NEG_SLOPE * zn)

    # ---- layer 1: Linear without any wrapper-side concat ---------------------
    # w1 rows are packed [op_in | pl | pd]; the scalar pd feature becomes a
    # broadcast FMA instead of a (B,1)x(1,H) matmul.
    w1_op = p_ref[0:op_dim, :]                               # (OP, H)
    w1_pl = p_ref[op_dim:op_dim + pl_dim, :]                 # (PL, H)
    w1_pd = p_ref[op_dim + pl_dim:op_dim + pl_dim + 1, :]    # (1,  H)
    z = (jnp.dot(op, w1_op, preferred_element_type=jnp.float32)
         + jnp.dot(plv, w1_pl, preferred_element_type=jnp.float32)
         + pd * w1_pd)
    h = bn_lrelu(z, 0)

    # ---- layers 2 & 3 ---------------------------------------------------------
    z = jnp.dot(h, p_ref[off["w2"]:off["w2"] + hidden, :],
                preferred_element_type=jnp.float32)
    h = bn_lrelu(z, 1)
    z = jnp.dot(h, p_ref[off["w3"]:off["w3"] + hidden, :],
                preferred_element_type=jnp.float32)
    h = bn_lrelu(z, 2)

    # ---- output Linear (wo lane-padded to H) + residual + clamp(0, 1) --------
    out64 = (jnp.dot(h, p_ref[off["wo"]:off["wo"] + hidden, :],
                     preferred_element_type=jnp.float32)
             + p_ref[off["bo"]:off["bo"] + 1, :])            # (B, H); lanes >= PL are 0
    out_ref[...] = jnp.clip(plv + out64[:, :pl_dim], 0.0, 1.0)


def plant_model_day_forward(pd, op_in, plv, packed_params):
    """pd: (N,B,1)  op_in: (N,B,OP)  plv: (N,B,PL)  packed_params: (ROWS,H) f32.

    One grid step per scenario (BN stats per scenario-batch, matching one PyTorch
    forward() call each); the packed parameter array is DMA'd once and stays
    resident in VMEM across the whole grid.
    """
    pd = pd.astype(jnp.float32)
    op_in = op_in.astype(jnp.float32)
    plv = plv.astype(jnp.float32)
    n, b, _ = pd.shape
    op_dim = op_in.shape[-1]
    pl_dim = plv.shape[-1]
    hidden = packed_params.shape[-1]
    off = _offsets(op_dim, pl_dim, hidden)
    assert packed_params.shape[0] == off["rows"]

    kernel = functools.partial(_plant_kernel, op_dim, pl_dim, hidden, off)

    cost = pl.CostEstimate(
        flops=2 * n * b * ((op_dim + pl_dim + 1) * hidden
                           + 2 * hidden * hidden + hidden * pl_dim),
        transcendentals=3 * n * hidden,
        bytes_accessed=4 * (packed_params.size
                            + n * b * (op_dim + pl_dim + 1)   # inputs
                            + n * b * pl_dim),                # output
    )

    grid_spec = pltpu.PrefetchScalarGridSpec(
        num_scalar_prefetch=0,
        grid=(n,),
        in_specs=[
            pl.BlockSpec((None, b, 1), lambda i: (i, 0, 0)),
            pl.BlockSpec((None, b, op_dim), lambda i: (i, 0, 0)),
            pl.BlockSpec((None, b, pl_dim), lambda i: (i, 0, 0)),
            # constant block index -> params DMA'd once, resident across the grid
            pl.BlockSpec((off["rows"], hidden), lambda i: (0, 0)),
        ],
        out_specs=pl.BlockSpec((None, b, pl_dim), lambda i: (i, 0, 0)),
    )

    return pl.pallas_call(
        kernel,
        out_shape=jax.ShapeDtypeStruct((n, b, pl_dim), jnp.float32),
        grid_spec=grid_spec,
        compiler_params=pltpu.CompilerParams(
            dimension_semantics=("parallel",)),   # shards scenarios across v7x's 2 TCs
        input_output_aliases={2: 0},              # plv buffer reused for the output
        cost_estimate=cost,
    )(pd, op_in, plv, packed_params)


def init_params(key, op_in_dim, pl_dim, hidden=HIDDEN):
    """Deterministic synthetic params, packed into ONE f32 (ROWS, hidden) array.

    Row layout (hidden lanes each):
      [0, 41)    w1   rows ordered [op_in | pl | pd] (input permutation absorbed)
      [41, 48)   zero pad
      [48, 112)  w2
      [112,176)  w3
      [176,240)  wo   -- (hidden, pl_dim) in lanes [0, pl_dim), zero elsewhere
      [240,246)  bn   -- g1, be1, g2, be2, g3, be3
      [246,247)  bo   -- lanes [0, pl_dim)
      [247,248)  zero pad
    Hidden-layer Linear biases b1/b2/b3 are returned ONLY for the reference: with
    train-mode BatchNorm they cancel exactly, so the kernel never sees them.
    """
    off = _offsets(op_in_dim, pl_dim, hidden)
    in_dim = op_in_dim + pl_dim + 1
    ks = jax.random.split(key, 10)

    def mat(k, r, c, scale=0.1):
        return scale * jax.random.normal(k, (r, c), jnp.float32)

    w1 = mat(ks[0], in_dim, hidden)      # rows packed [op_in | pl | pd]
    w2 = mat(ks[1], hidden, hidden)
    w3 = mat(ks[2], hidden, hidden)
    wo = mat(ks[3], hidden, pl_dim)
    bo = 0.01 * jax.random.normal(ks[4], (1, pl_dim), jnp.float32)

    b1 = 0.01 * jax.random.normal(ks[5], (1, hidden), jnp.float32)
    b2 = 0.01 * jax.random.normal(ks[6], (1, hidden), jnp.float32)
    b3 = 0.01 * jax.random.normal(ks[7], (1, hidden), jnp.float32)

    g = 1.0 + 0.05 * jax.random.normal(ks[8], (3, hidden), jnp.float32)
    be = 0.05 * jax.random.normal(ks[9], (3, hidden), jnp.float32)

    packed = jnp.zeros((off["rows"], hidden), jnp.float32)
    packed = packed.at[0:in_dim].set(w1)
    packed = packed.at[off["w2"]:off["w2"] + hidden].set(w2)
    packed = packed.at[off["w3"]:off["w3"] + hidden].set(w3)
    packed = packed.at[off["wo"]:off["wo"] + hidden, 0:pl_dim].set(wo)
    packed = packed.at[off["bn"]:off["bn"] + 6].set(
        jnp.stack([g[0], be[0], g[1], be[1], g[2], be[2]], axis=0))
    packed = packed.at[off["bo"], 0:pl_dim].set(bo[0])

    ref = dict(w1=w1, w2=w2, w3=w3, wo=wo, bo=bo, b1=b1, b2=b2, b3=b3, g=g, be=be)
    return packed, ref


def reference_forward(pd, op_in, plv, ref):
    """Pure-JAX reference with identical semantics (keeps the cancelled biases).
    BatchNorm statistics per scenario-batch (vmapped over the scenario axis)."""
    def one(pd_s, op_s, pl_s):
        x = jnp.concatenate([op_s, pl_s, pd_s], axis=1)   # matches w1 row packing

        def layer(h, w, b, g, be):
            z = h @ w + b
            m = jnp.mean(z, axis=0, keepdims=True)
            v = jnp.mean((z - m) ** 2, axis=0, keepdims=True)
            zn = (z - m) / jnp.sqrt(v + EPS) * g + be
            return jnp.where(zn >= 0, zn, NEG_SLOPE * zn)

        h = layer(x, ref["w1"], ref["b1"], ref["g"][0:1], ref["be"][0:1])
        h = layer(h, ref["w2"], ref["b2"], ref["g"][1:2], ref["be"][1:2])
        h = layer(h, ref["w3"], ref["b3"], ref["g"][2:3], ref["be"][2:3])
        out = h @ ref["wo"] + ref["bo"]
        return jnp.clip(pl_s + out, 0.0, 1.0)

    return jax.vmap(one)(pd, op_in, plv)


if __name__ == "__main__":
    op_in_dim, pl_dim = 24, 16       # op_in = 24 hourly values x 1 feature; pd = 1 scalar
    n_scen, batch = 4, 8             # grid over scenarios; BN batch of 8 per scenario

    key = jax.random.PRNGKey(0)
    k_pd, k_op, k_pl, k_par = jax.random.split(key, 4)

    pd = jax.random.uniform(k_pd, (n_scen, batch, 1), jnp.float32)
    op_in = jax.random.uniform(k_op, (n_scen, batch, op_in_dim), jnp.float32)
    plv = jax.random.uniform(k_pl, (n_scen, batch, pl_dim), jnp.float32)
    packed, ref_params = init_params(k_par, op_in_dim, pl_dim)

    # Reference computed first (plv is aliased into the kernel output buffer).
    ref = jax.block_until_ready(reference_forward(pd, op_in, plv, ref_params))

    out = plant_model_day_forward(pd, op_in, plv, packed)
    out = jax.block_until_ready(out)

    assert out.shape == (n_scen, batch, pl_dim)
    assert jnp.allclose(out, ref, atol=1e-4, rtol=1e-4), "mismatch vs reference"

    print("KERNEL_OK")
</pallas_src>

<mosaic_0001>
module attributes {stable_mosaic.version = 11 : i64} {
  func.func @_plant_kernel(%arg0: i32, %arg1: memref<1x8x1xf32, #tpu.memory_space<vmem>>, %arg2: memref<1x8x24xf32, #tpu.memory_space<vmem>>, %arg3: memref<1x8x16xf32, #tpu.memory_space<vmem>>, %arg4: memref<248x64xf32, #tpu.memory_space<vmem>>, %arg5: memref<1x8x16xf32, #tpu.memory_space<vmem>>) attributes {dimension_semantics = [#tpu.dimension_semantics<parallel>], iteration_bounds = array<i64: 4>, scalar_prefetch = 0 : i64, scratch_operands = 0 : i64, tpu.core_type = #tpu.core_type<tc>, window_params = [{transform_indices = @transform_0, window_bounds = array<i64: 1, 8, 1>}, {transform_indices = @transform_1, window_bounds = array<i64: 1, 8, 24>}, {transform_indices = @transform_2, window_bounds = array<i64: 1, 8, 16>}, {pipeline_mode = #tpu.pipeline_mode<synchronous>, transform_indices = @transform_3, window_bounds = array<i64: 248, 64>}, {transform_indices = @transform_4, window_bounds = array<i64: 1, 8, 16>}]} {
    %c0 = arith.constant 0 : index
    %c0_0 = arith.constant 0 : index
    %c0_1 = arith.constant 0 : index
    %0 = vector.load %arg1[%c0, %c0_0, %c0_1] : memref<1x8x1xf32, #tpu.memory_space<vmem>>, vector<1x8x1xf32>
    %1 = vector.shape_cast %0 : vector<1x8x1xf32> to vector<8x1xf32>
    %c0_2 = arith.constant 0 : index
    %c0_3 = arith.constant 0 : index
    %c0_4 = arith.constant 0 : index
    %2 = vector.load %arg2[%c0_2, %c0_3, %c0_4] : memref<1x8x24xf32, #tpu.memory_space<vmem>>, vector<1x8x24xf32>
    %3 = vector.shape_cast %2 : vector<1x8x24xf32> to vector<8x24xf32>
    %c0_5 = arith.constant 0 : index
    %c0_6 = arith.constant 0 : index
    %c0_7 = arith.constant 0 : index
    %4 = vector.load %arg3[%c0_5, %c0_6, %c0_7] : memref<1x8x16xf32, #tpu.memory_space<vmem>>, vector<1x8x16xf32>
    %5 = vector.shape_cast %4 : vector<1x8x16xf32> to vector<8x16xf32>
    %c0_8 = arith.constant 0 : index
    %c0_9 = arith.constant 0 : index
    %6 = vector.load %arg4[%c0_8, %c0_9] : memref<248x64xf32, #tpu.memory_space<vmem>>, vector<24x64xf32>
    %c24 = arith.constant 24 : index
    %c0_10 = arith.constant 0 : index
    %7 = vector.load %arg4[%c24, %c0_10] : memref<248x64xf32, #tpu.memory_space<vmem>>, vector<16x64xf32>
    %c40 = arith.constant 40 : index
    %c0_11 = arith.constant 0 : index
    %8 = vector.load %arg4[%c40, %c0_11] : memref<248x64xf32, #tpu.memory_space<vmem>>, vector<1x64xf32>
    %cst = arith.constant dense<0.000000e+00> : vector<8x64xf32>
    %9 = tpu.matmul %3, %6, %cst {dimension_numbers = #tpu.dot_dimension_numbers<[1], [0], [0], [1], [0, 0, 1, 1], [], []>} : vector<8x24xf32>, vector<24x64xf32>, vector<8x64xf32> -> vector<8x64xf32>
    %cst_12 = arith.constant dense<0.000000e+00> : vector<8x64xf32>
    %10 = tpu.matmul %5, %7, %cst_12 {dimension_numbers = #tpu.dot_dimension_numbers<[1], [0], [0], [1], [0, 0, 1, 1], [], []>} : vector<8x16xf32>, vector<16x64xf32>, vector<8x64xf32> -> vector<8x64xf32>
    %11 = arith.addf %9, %10 : vector<8x64xf32>
    %12 = vector.broadcast %1 : vector<8x1xf32> to vector<8x64xf32>
    %13 = vector.broadcast %8 : vector<1x64xf32> to vector<8x64xf32>
    %14 = arith.mulf %12, %13 : vector<8x64xf32>
    %15 = arith.addf %11, %14 : vector<8x64xf32>
    %c240 = arith.constant 240 : index
    %c0_13 = arith.constant 0 : index
    %16 = vector.load %arg4[%c240, %c0_13] : memref<248x64xf32, #tpu.memory_space<vmem>>, vector<1x64xf32>
    %c241 = arith.constant 241 : index
    %c0_14 = arith.constant 0 : index
    %17 = vector.load %arg4[%c241, %c0_14] : memref<248x64xf32, #tpu.memory_space<vmem>>, vector<1x64xf32>
    %cst_15 = arith.constant dense<0.000000e+00> : vector<64xf32>
    %18 = vector.multi_reduction <add>, %15, %cst_15 [0] : vector<8x64xf32> to vector<64xf32>
    %19 = vector.shape_cast %18 : vector<64xf32> to vector<1x64xf32>
    %cst_16 = arith.constant 8.000000e+00 : f32
    %20 = vector.broadcast %cst_16 : f32 to vector<1x64xf32>
    %21 = arith.divf %19, %20 : vector<1x64xf32>
    %22 = vector.broadcast %21 : vector<1x64xf32> to vector<8x64xf32>
    %23 = arith.subf %15, %22 : vector<8x64xf32>
    %24 = arith.mulf %23, %23 : vector<8x64xf32>
    %cst_17 = arith.constant dense<0.000000e+00> : vector<64xf32>
    %25 = vector.multi_reduction <add>, %24, %cst_17 [0] : vector<8x64xf32> to vector<64xf32>
    %26 = vector.shape_cast %25 : vector<64xf32> to vector<1x64xf32>
    %cst_18 = arith.constant 8.000000e+00 : f32
    %27 = vector.broadcast %cst_18 : f32 to vector<1x64xf32>
    %28 = arith.divf %26, %27 : vector<1x64xf32>
    %cst_19 = arith.constant 9.99999974E-6 : f32
    %29 = vector.broadcast %cst_19 : f32 to vector<1x64xf32>
    %30 = arith.addf %28, %29 : vector<1x64xf32>
    %31 = math.rsqrt %30 : vector<1x64xf32>
    %32 = arith.mulf %16, %31 : vector<1x64xf32>
    %33 = arith.mulf %21, %32 : vector<1x64xf32>
    %34 = arith.subf %17, %33 : vector<1x64xf32>
    %35 = vector.broadcast %32 : vector<1x64xf32> to vector<8x64xf32>
    %36 = arith.mulf %15, %35 : vector<8x64xf32>
    %37 = vector.broadcast %34 : vector<1x64xf32> to vector<8x64xf32>
    %38 = arith.addf %36, %37 : vector<8x64xf32>
    %cst_20 = arith.constant 0.00999999977 : f32
    %39 = vector.broadcast %cst_20 : f32 to vector<8x64xf32>
    %40 = arith.mulf %39, %38 : vector<8x64xf32>
    %41 = arith.maximumf %38, %40 : vector<8x64xf32>
    %c48 = arith.constant 48 : index
    %c0_21 = arith.constant 0 : index
    %42 = vector.load %arg4[%c48, %c0_21] : memref<248x64xf32, #tpu.memory_space<vmem>>, vector<64x64xf32>
    %cst_22 = arith.constant dense<0.000000e+00> : vector<8x64xf32>
    %43 = tpu.matmul %41, %42, %cst_22 {dimension_numbers = #tpu.dot_dimension_numbers<[1], [0], [0], [1], [0, 0, 1, 1], [], []>} : vector<8x64xf32>, vector<64x64xf32>, vector<8x64xf32> -> vector<8x64xf32>
    %c242 = arith.constant 242 : index
    %c0_23 = arith.constant 0 : index
    %44 = vector.load %arg4[%c242, %c0_23] : memref<248x64xf32, #tpu.memory_space<vmem>>, vector<1x64xf32>
    %c243 = arith.constant 243 : index
    %c0_24 = arith.constant 0 : index
    %45 = vector.load %arg4[%c243, %c0_24] : memref<248x64xf32, #tpu.memory_space<vmem>>, vector<1x64xf32>
    %cst_25 = arith.constant dense<0.000000e+00> : vector<64xf32>
    %46 = vector.multi_reduction <add>, %43, %cst_25 [0] : vector<8x64xf32> to vector<64xf32>
    %47 = vector.shape_cast %46 : vector<64xf32> to vector<1x64xf32>
    %cst_26 = arith.constant 8.000000e+00 : f32
    %48 = vector.broadcast %cst_26 : f32 to vector<1x64xf32>
    %49 = arith.divf %47, %48 : vector<1x64xf32>
    %50 = vector.broadcast %49 : vector<1x64xf32> to vector<8x64xf32>
    %51 = arith.subf %43, %50 : vector<8x64xf32>
    %52 = arith.mulf %51, %51 : vector<8x64xf32>
    %cst_27 = arith.constant dense<0.000000e+00> : vector<64xf32>
    %53 = vector.multi_reduction <add>, %52, %cst_27 [0] : vector<8x64xf32> to vector<64xf32>
    %54 = vector.shape_cast %53 : vector<64xf32> to vector<1x64xf32>
    %cst_28 = arith.constant 8.000000e+00 : f32
    %55 = vector.broadcast %cst_28 : f32 to vector<1x64xf32>
    %56 = arith.divf %54, %55 : vector<1x64xf32>
    %cst_29 = arith.constant 9.99999974E-6 : f32
    %57 = vector.broadcast %cst_29 : f32 to vector<1x64xf32>
    %58 = arith.addf %56, %57 : vector<1x64xf32>
    %59 = math.rsqrt %58 : vector<1x64xf32>
    %60 = arith.mulf %44, %59 : vector<1x64xf32>
    %61 = arith.mulf %49, %60 : vector<1x64xf32>
    %62 = arith.subf %45, %61 : vector<1x64xf32>
    %63 = vector.broadcast %60 : vector<1x64xf32> to vector<8x64xf32>
    %64 = arith.mulf %43, %63 : vector<8x64xf32>
    %65 = vector.broadcast %62 : vector<1x64xf32> to vector<8x64xf32>
    %66 = arith.addf %64, %65 : vector<8x64xf32>
    %cst_30 = arith.constant 0.00999999977 : f32
    %67 = vector.broadcast %cst_30 : f32 to vector<8x64xf32>
    %68 = arith.mulf %67, %66 : vector<8x64xf32>
    %69 = arith.maximumf %66, %68 : vector<8x64xf32>
    %c112 = arith.constant 112 : index
    %c0_31 = arith.constant 0 : index
    %70 = vector.load %arg4[%c112, %c0_31] : memref<248x64xf32, #tpu.memory_space<vmem>>, vector<64x64xf32>
    %cst_32 = arith.constant dense<0.000000e+00> : vector<8x64xf32>
    %71 = tpu.matmul %69, %70, %cst_32 {dimension_numbers = #tpu.dot_dimension_numbers<[1], [0], [0], [1], [0, 0, 1, 1], [], []>} : vector<8x64xf32>, vector<64x64xf32>, vector<8x64xf32> -> vector<8x64xf32>
    %c244 = arith.constant 244 : index
    %c0_33 = arith.constant 0 : index
    %72 = vector.load %arg4[%c244, %c0_33] : memref<248x64xf32, #tpu.memory_space<vmem>>, vector<1x64xf32>
    %c245 = arith.constant 245 : index
    %c0_34 = arith.constant 0 : index
    %73 = vector.load %arg4[%c245, %c0_34] : memref<248x64xf32, #tpu.memory_space<vmem>>, vector<1x64xf32>
    %cst_35 = arith.constant dense<0.000000e+00> : vector<64xf32>
    %74 = vector.multi_reduction <add>, %71, %cst_35 [0] : vector<8x64xf32> to vector<64xf32>
    %75 = vector.shape_cast %74 : vector<64xf32> to vector<1x64xf32>
    %cst_36 = arith.constant 8.000000e+00 : f32
    %76 = vector.broadcast %cst_36 : f32 to vector<1x64xf32>
    %77 = arith.divf %75, %76 : vector<1x64xf32>
    %78 = vector.broadcast %77 : vector<1x64xf32> to vector<8x64xf32>
    %79 = arith.subf %71, %78 : vector<8x64xf32>
    %80 = arith.mulf %79, %79 : vector<8x64xf32>
    %cst_37 = arith.constant dense<0.000000e+00> : vector<64xf32>
    %81 = vector.multi_reduction <add>, %80, %cst_37 [0] : vector<8x64xf32> to vector<64xf32>
    %82 = vector.shape_cast %81 : vector<64xf32> to vector<1x64xf32>
    %cst_38 = arith.constant 8.000000e+00 : f32
    %83 = vector.broadcast %cst_38 : f32 to vector<1x64xf32>
    %84 = arith.divf %82, %83 : vector<1x64xf32>
    %cst_39 = arith.constant 9.99999974E-6 : f32
    %85 = vector.broadcast %cst_39 : f32 to vector<1x64xf32>
    %86 = arith.addf %84, %85 : vector<1x64xf32>
    %87 = math.rsqrt %86 : vector<1x64xf32>
    %88 = arith.mulf %72, %87 : vector<1x64xf32>
    %89 = arith.mulf %77, %88 : vector<1x64xf32>
    %90 = arith.subf %73, %89 : vector<1x64xf32>
    %91 = vector.broadcast %88 : vector<1x64xf32> to vector<8x64xf32>
    %92 = arith.mulf %71, %91 : vector<8x64xf32>
    %93 = vector.broadcast %90 : vector<1x64xf32> to vector<8x64xf32>
    %94 = arith.addf %92, %93 : vector<8x64xf32>
    %cst_40 = arith.constant 0.00999999977 : f32
    %95 = vector.broadcast %cst_40 : f32 to vector<8x64xf32>
    %96 = arith.mulf %95, %94 : vector<8x64xf32>
    %97 = arith.maximumf %94, %96 : vector<8x64xf32>
    %c176 = arith.constant 176 : index
    %c0_41 = arith.constant 0 : index
    %98 = vector.load %arg4[%c176, %c0_41] : memref<248x64xf32, #tpu.memory_space<vmem>>, vector<64x64xf32>
    %cst_42 = arith.constant dense<0.000000e+00> : vector<8x64xf32>
    %99 = tpu.matmul %97, %98, %cst_42 {dimension_numbers = #tpu.dot_dimension_numbers<[1], [0], [0], [1], [0, 0, 1, 1], [], []>} : vector<8x64xf32>, vector<64x64xf32>, vector<8x64xf32> -> vector<8x64xf32>
    %c246 = arith.constant 246 : index
    %c0_43 = arith.constant 0 : index
    %100 = vector.load %arg4[%c246, %c0_43] : memref<248x64xf32, #tpu.memory_space<vmem>>, vector<1x64xf32>
    %101 = vector.broadcast %100 : vector<1x64xf32> to vector<8x64xf32>
    %102 = arith.addf %99, %101 : vector<8x64xf32>
    %103 = vector.extract_strided_slice %102 {offsets = [0, 0], sizes = [8, 16], strides = [1, 1]} : vector<8x64xf32> to vector<8x16xf32>
    %104 = arith.addf %5, %103 : vector<8x16xf32>
    %cst_44 = arith.constant 0.000000e+00 : f32
    %cst_45 = arith.constant 1.000000e+00 : f32
    %105 = vector.broadcast %cst_44 : f32 to vector<8x16xf32>
    %106 = arith.maximumf %105, %104 : vector<8x16xf32>
    %107 = vector.broadcast %cst_45 : f32 to vector<8x16xf32>
    %108 = arith.minimumf %107, %106 : vector<8x16xf32>
    %c0_46 = arith.constant 0 : index
    %c0_47 = arith.constant 0 : index
    %c0_48 = arith.constant 0 : index
    %109 = vector.load %arg5[%c0_46, %c0_47, %c0_48] : memref<1x8x16xf32, #tpu.memory_space<vmem>>, vector<1x8x16xf32>
    %110 = vector.shape_cast %109 : vector<1x8x16xf32> to vector<8x16xf32>
    %111 = vector.shape_cast %108 : vector<8x16xf32> to vector<1x8x16xf32>
    tpu.vector_store %arg5[%c0_46, %c0_47, %c0_48], %111 {strides = array<i32>} : memref<1x8x16xf32, #tpu.memory_space<vmem>>, vector<1x8x16xf32>,
    return
  }
  func.func @transform_0(%arg0: i32) -> (i32, i32, i32) {
    %c0_i32 = arith.constant 0 : i32
    %c0_i32_0 = arith.constant 0 : i32
    %c0_i32_1 = arith.constant 0 : i32
    return %arg0, %c0_i32, %c0_i32_0 : i32, i32, i32
  }
  func.func @transform_1(%arg0: i32) -> (i32, i32, i32) {
    %c0_i32 = arith.constant 0 : i32
    %c0_i32_0 = arith.constant 0 : i32
    %c0_i32_1 = arith.constant 0 : i32
    return %arg0, %c0_i32, %c0_i32_0 : i32, i32, i32
  }
  func.func @transform_2(%arg0: i32) -> (i32, i32, i32) {
    %c0_i32 = arith.constant 0 : i32
    %c0_i32_0 = arith.constant 0 : i32
    %c0_i32_1 = arith.constant 0 : i32
    return %arg0, %c0_i32, %c0_i32_0 : i32, i32, i32
  }
  func.func @transform_3(%arg0: i32) -> (i32, i32) {
    %c0_i32 = arith.constant 0 : i32
    %c0_i32_0 = arith.constant 0 : i32
    %c0_i32_1 = arith.constant 0 : i32
    return %c0_i32, %c0_i32_0 : i32, i32
  }
  func.func @transform_4(%arg0: i32) -> (i32, i32, i32) {
    %c0_i32 = arith.constant 0 : i32
    %c0_i32_0 = arith.constant 0 : i32
    %c0_i32_1 = arith.constant 0 : i32
    return %arg0, %c0_i32, %c0_i32_0 : i32, i32, i32
  }
}

</mosaic_0001>

<llo_original>
// kernel: tpu_custom_call.1
$region0: #{tpu_custom_call.1}
  #allocation0 [shape = 'u32[]', space=smem, size = 0x4, offset = 0x4, fixed_abs, tag = 'smem constant byte address 0x4 - core index']
  #allocation1 [shape = 'u32[144,128]{1,0:T(1,128)}', space=vmem, size = 0x12000, scoped, tag = 'internal scratch']
  %s0 = inlined_call_operand.vmem [shape: f32[4,8,1], index: 0, kind: input, shape index: {}]
  %s1 = inlined_call_operand.vmem [shape: f32[4,8,24], index: 1, kind: input, shape index: {}]
  %s2 = inlined_call_operand.hbm [shape: f32[4,8,16], index: 2, kind: input, shape index: {}, may-alias: {2,4}]
  %s3 = inlined_call_operand.vmem [shape: f32[248,64], index: 3, kind: input, shape index: {}]
  %s4 = inlined_call_operand.hbm [shape: f32[4,8,16], index: 4, kind: output, shape index: {}, may-alias: {2,4}]
  %s5 = sld [smem:[#allocation0]]
  $region53: #{tpu_custom_call.1} parent=0
    _
  %s7 = ssub.s32 1, %s5
  %s8 = scalar_select 0, %s7, %s5
  $region1: #{tpu_custom_call.1} parent=0
    #allocation2 [shape = 'u8[8192]{0}', space=vmem, size = 0x2000, scoped, tag = 'input window, operand 2']
    #allocation3 [shape = 's32[2]{0}', space=sflag, size = 0x8, scoped, tag = 'scoped memory for tpu_custom_call.1']
    #allocation4 [shape = 's32[2]{0}', space=sflag, size = 0x8, scoped, tag = 'scoped memory for tpu_custom_call.1']
    #allocation5 [shape = 'u8[8192]{0}', space=vmem, size = 0x2000, scoped, tag = 'output window, operand 0']
    %9 = vsyncpa [#allocation3], 0
    %s10 = scalar_lea.sflag [#allocation3], 1
    %11 = vsyncpa %s10, 0
    %12 = vsyncpa [#allocation4], 0
    %s13 = scalar_lea.sflag [#allocation4], 1
    %14 = vsyncpa %s13, 0
    loop: start=0, step=1, limit=6
    $region2: #{tpu_custom_call.1} parent=1 // loop_pre_header
      _
    $region3: #{tpu_custom_call.1} parent=1 // loop_header
      %s16 = sphi 0, %s20
      %p17 = scmp.ge.s32.totalorder %s16, 6
      %s26 = sphi 0, %s28
      %s29 = sphi 0, %s26
      %s30 = sphi 0, %s29
      %s46 = sphi 0, %s30
      %s52 = sphi 0, %s54
      %s55 = sphi 0, %s52
      %s56 = sphi 0, %s55
      %s72 = sphi 0, %s56
      %s78 = sphi 0, %s80
      %s81 = sphi 0, %s78
      %s82 = sphi 0, %s81
      %s98 = sphi 0, %s82
      %s102 = sphi 0, %s102
      %s104 = sphi 0, %s102
      %s105 = sphi 0, %s104
      %s119 = sphi 0, %s105
      %s125 = sphi 0, %s127
      %s128 = sphi 0, %s125
      %s129 = sphi 0, %s128
      %s145 = sphi 0, %s129
    $region4: #{tpu_custom_call.1} parent=1 // loop_header_branch
      %19 = sbr.rel (%p17) target = $region8
    $region5: #{tpu_custom_call.1} parent=1 // loop_body
      %s21 = ssub.s32 %s16, 1
      %s22 = ssub.s32 %s16, 2
      %s23 = sadd.s32 %s16, 1
      %s24 = ssub.s32 %s16, %s23
      %p25 = scmp.eq.s32.totalorder %s24, 0
      %s27 = sadd.s32 %s26, 1
      %s28 = scalar_select %p25, %s26, %s27
      %p31 = pneg %p25
      %p32 = scmp.eq.s32.totalorder %s16, 3
      %p33 = por %p31, %p32
      %p34 = scmp.ne.s32.totalorder %s26, %s29
      %p35 = scmp.eq.s32.totalorder %s16, 0
      %p36 = por %p34, %p35
      %p37 = scmp.ne.s32.totalorder %s26, %s29
      %p38 = scmp.eq.s32.totalorder %s21, 3
      %p39 = por %p37, %p38
      %p40 = scmp.ne.s32.totalorder %s29, %s30
      %p41 = scmp.eq.s32.totalorder %s21, 0
      %p42 = por %p40, %p41
      %p43 = scmp.ne.s32.totalorder %s29, %s30
      %p44 = scmp.eq.s32.totalorder %s22, 3
      %p45 = por %p43, %p44
      %p47 = scmp.ne.s32.totalorder %s30, %s46
      %p48 = scmp.eq.s32.totalorder %s22, 0
      %p49 = por %p47, %p48
      %s50 = ssub.s32 %s16, %s23
      %p51 = scmp.eq.s32.totalorder %s50, 0
      %s53 = sadd.s32 %s52, 1
      %s54 = scalar_select %p51, %s52, %s53
      %p57 = pneg %p51
      %p58 = scmp.eq.s32.totalorder %s16, 3
      %p59 = por %p57, %p58
      %p60 = scmp.ne.s32.totalorder %s52, %s55
      %p61 = scmp.eq.s32.totalorder %s16, 0
      %p62 = por %p60, %p61
      %p63 = scmp.ne.s32.totalorder %s52, %s55
      %p64 = scmp.eq.s32.totalorder %s21, 3
      %p65 = por %p63, %p64
      %p66 = scmp.ne.s32.totalorder %s55, %s56
      %p67 = scmp.eq.s32.totalorder %s21, 0
      %p68 = por %p66, %p67
      %p69 = scmp.ne.s32.totalorder %s55, %s56
      %p70 = scmp.eq.s32.totalorder %s22, 3
      %p71 = por %p69, %p70
      %p73 = scmp.ne.s32.totalorder %s56, %s72
      %p74 = scmp.eq.s32.totalorder %s22, 0
      %p75 = por %p73, %p74
      %s76 = ssub.s32 %s16, %s23
      %p77 = scmp.eq.s32.totalorder %s76, 0
      %s79 = sadd.s32 %s78, 1
      %s80 = scalar_select %p77, %s78, %s79
      %p83 = pneg %p77
      %p84 = scmp.eq.s32.totalorder %s16, 3
      %p85 = por %p83, %p84
      %p86 = scmp.ne.s32.totalorder %s78, %s81
      %p87 = scmp.eq.s32.totalorder %s16, 0
      %p88 = por %p86, %p87
      %p89 = scmp.ne.s32.totalorder %s78, %s81
      %p90 = scmp.eq.s32.totalorder %s21, 3
      %p91 = por %p89, %p90
      %p92 = scmp.ne.s32.totalorder %s81, %s82
      %p93 = scmp.eq.s32.totalorder %s21, 0
      %p94 = por %p92, %p93
      %p95 = scmp.ne.s32.totalorder %s81, %s82
      %p96 = scmp.eq.s32.totalorder %s22, 3
      %p97 = por %p95, %p96
      %p99 = scmp.ne.s32.totalorder %s82, %s98
      %p100 = scmp.eq.s32.totalorder %s22, 0
      %p101 = por %p99, %p100
      %s103 = sadd.s32 %s102, 1
      %p106 = scmp.eq.s32.totalorder %s16, 3
      %p107 = scmp.ne.s32.totalorder %s102, %s104
      %p108 = scmp.eq.s32.totalorder %s16, 0
      %p109 = por %p107, %p108
      %p110 = scmp.ne.s32.totalorder %s102, %s104
      %p111 = scmp.eq.s32.totalorder %s21, 3
      %p112 = por %p110, %p111
      %p113 = scmp.ne.s32.totalorder %s104, %s105
      %p114 = scmp.eq.s32.totalorder %s21, 0
      %p115 = por %p113, %p114
      %p116 = scmp.ne.s32.totalorder %s104, %s105
      %p117 = scmp.eq.s32.totalorder %s22, 3
      %p118 = por %p116, %p117
      %p120 = scmp.ne.s32.totalorder %s105, %s119
      %p121 = scmp.eq.s32.totalorder %s22, 0
      %p122 = por %p120, %p121
      %s123 = ssub.s32 %s16, %s23
      %p124 = scmp.eq.s32.totalorder %s123, 0
      %s126 = sadd.s32 %s125, 1
      %s127 = scalar_select %p124, %s125, %s126
      %p130 = pneg %p124
      %p131 = scmp.eq.s32.totalorder %s16, 3
      %p132 = por %p130, %p131
      %p133 = scmp.ne.s32.totalorder %s125, %s128
      %p134 = scmp.eq.s32.totalorder %s16, 0
      %p135 = por %p133, %p134
      %p136 = scmp.ne.s32.totalorder %s125, %s128
      %p137 = scmp.eq.s32.totalorder %s21, 3
      %p138 = por %p136, %p137
      %p139 = scmp.ne.s32.totalorder %s128, %s129
      %p140 = scmp.eq.s32.totalorder %s21, 0
      %p141 = por %p139, %p140
      %p142 = scmp.ne.s32.totalorder %s128, %s129
      %p143 = scmp.eq.s32.totalorder %s22, 3
      %p144 = por %p142, %p143
      %p146 = scmp.ne.s32.totalorder %s129, %s145
      %p147 = scmp.eq.s32.totalorder %s22, 0
      %p148 = por %p146, %p147
      %p149 = scmp.le.s32.totalorder 1, %s16
      %p150 = scmp.lt.s32.totalorder %s16, 5
      %p151 = pnand %p149, %p150
      %p152 = pneg %p151
      // Predicated region
      $region9: #{tpu_custom_call.1} parent=5 // pred_check
        _
      $region10: #{tpu_custom_call.1} parent=5 // pred_check_branch
        %154 = sbr.rel (%p151) target = $region12
      $region11: #{tpu_custom_call.1} parent=5 // pred_region
        %s155 = ssub.s32 %s16, 1
        // Predicated region
        $region13: #{tpu_custom_call.1} parent=11 // pred_check
          %p156 = pneg %p115
        $region14: #{tpu_custom_call.1} parent=11 // pred_check_branch
          %158 = sbr.rel (%p156) target = $region16
        $region15: #{tpu_custom_call.1} parent=11 // pred_region
          _
        $region16: #{tpu_custom_call.1} parent=11 // pred_fallthru
          _
      $region12: #{tpu_custom_call.1} parent=5 // pred_fallthru
        _
      %p159 = scmp.lt.s32.totalorder %s16, 4
      // Predicated region
      $region17: #{tpu_custom_call.1} parent=5 // pred_check
        %p160 = pneg %p159
      $region18: #{tpu_custom_call.1} parent=5 // pred_check_branch
        %162 = sbr.rel (%p160) target = $region20
      $region19: #{tpu_custom_call.1} parent=5 // pred_region
        // Predicated region
        $region21: #{tpu_custom_call.1} parent=19 // pred_check
          %p163 = pneg %p36
        $region22: #{tpu_custom_call.1} parent=19 // pred_check_branch
          %165 = sbr.rel (%p163) target = $region24
        $region23: #{tpu_custom_call.1} parent=19 // pred_region
          %p166 = scmp.lt.s32.totalorder %s16, 3
          %s167 = scalar_select %p166, %s16, 3
          %s168 = smul.addr %s167, 8
          %s169 = scalar_lea.vmem %s0, %s168
        $region24: #{tpu_custom_call.1} parent=19 // pred_fallthru
          _
        // Predicated region
        $region25: #{tpu_custom_call.1} parent=19 // pred_check
          %p170 = pneg %p62
        $region26: #{tpu_custom_call.1} parent=19 // pred_check_branch
          %172 = sbr.rel (%p170) target = $region28
        $region27: #{tpu_custom_call.1} parent=19 // pred_region
          %p173 = scmp.lt.s32.totalorder %s16, 3
          %s174 = scalar_select %p173, %s16, 3
          %s175 = smul.addr %s174, 8
          %s176 = scalar_lea.vmem %s1, %s175
        $region28: #{tpu_custom_call.1} parent=19 // pred_fallthru
          _
        // Predicated region
        $region29: #{tpu_custom_call.1} parent=19 // pred_check
          %p177 = pneg %p88
        $region30: #{tpu_custom_call.1} parent=19 // pred_check_branch
          %179 = sbr.rel (%p177) target = $region32
        $region31: #{tpu_custom_call.1} parent=19 // pred_region
          %s180 = sand.u32 %s78, 1
          %s181 = scalar_lea.sflag [#allocation3], %s180
          %s182 = sand.u32 %s78, 1
          %s183 = smul.addr %s182, 8
          %s184 = scalar_lea.vmem [#allocation2], %s183
          %s186 = ssub.s32 128, 128
          %187 = vsyncadd %s181, %s186
          %s188 = smul.addr %s16, 128
          %s189 = scalar_lea.hbm %s2, %s188
          %s191 = sshll.u32 %s184, 4
          %s192 = int_to_ptr.vmem [resolvable:$true] %s191
          %194 = dma.hbm_to_vmem [thread:$0]  %s189, 128, %s192, %s181
        $region32: #{tpu_custom_call.1} parent=19 // pred_fallthru
          _
      $region20: #{tpu_custom_call.1} parent=5 // pred_fallthru
        _
      %p195 = scmp.le.s32.totalorder 1, %s16
      %p196 = scmp.lt.s32.totalorder %s16, 5
      %p197 = pnand %p195, %p196
      %p198 = pneg %p197
      // Predicated region
      $region33: #{tpu_custom_call.1} parent=5 // pred_check
        _
      $region34: #{tpu_custom_call.1} parent=5 // pred_check_branch
        %200 = sbr.rel (%p197) target = $region36
      $region35: #{tpu_custom_call.1} parent=5 // pred_region
        %s201 = ssub.s32 %s16, 1
        %s202 = sand.u32 %s81, 1
        %s203 = scalar_lea.sflag [#allocation3], %s202
        %s204 = sand.u32 %s81, 1
        %s205 = smul.addr %s204, 8
        %s206 = scalar_lea.vmem [#allocation2], %s205
        // Predicated region
        $region37: #{tpu_custom_call.1} parent=35 // pred_check
          %p207 = pneg %p94
        $region38: #{tpu_custom_call.1} parent=35 // pred_check_branch
          %209 = sbr.rel (%p207) target = $region40
        $region39: #{tpu_custom_call.1} parent=35 // pred_region
          %210 = dma.done %s203, 128
        $region40: #{tpu_custom_call.1} parent=35 // pred_fallthru
          _
        %p211 = scmp.lt.s32.totalorder %s21, 3
        %s212 = scalar_select %p211, %s21, 3
        %s213 = smul.addr %s212, 8
        %s214 = scalar_lea.vmem %s0, %s213
        %p215 = pneg %p42
        %p216 = pneg %p39
        %p217 = scmp.lt.s32.totalorder %s21, 3
        %s218 = scalar_select %p217, %s21, 3
        %s219 = smul.addr %s218, 8
        %s220 = scalar_lea.vmem %s1, %s219
        %p221 = pneg %p68
        %p222 = pneg %p65
        %s223 = sand.u32 %s81, 1
        %s224 = scalar_lea.sflag [#allocation3], %s223
        %s225 = sand.u32 %s81, 1
        %s226 = smul.addr %s225, 8
        %s227 = scalar_lea.vmem [#allocation2], %s226
        %p228 = pneg %p94
        %p229 = pneg %p91
        %p230 = pneg %p115
        %p231 = pneg %p112
        %p232 = pneg %p141
        %p233 = pneg %p138
        %s234 = sand.u32 %s128, 1
        %s235 = scalar_lea.sflag [#allocation4], %s234
        %s236 = sand.u32 %s128, 1
        %s237 = smul.addr %s236, 8
        %s238 = scalar_lea.vmem [#allocation5], %s237
        %p239 = scmp.lt.s32.totalorder %s21, 3
        %s240 = scalar_select %p239, %s21, 3
        %s241 = smul.addr %s240, 8
        %s242 = scalar_lea.vmem %s0, %s241
        %p243 = scmp.lt.s32.totalorder %s21, 3
        %s244 = scalar_select %p243, %s21, 3
        %s245 = smul.addr %s244, 8
        %s246 = scalar_lea.vmem %s1, %s245
        %v247 = vld [vmem:[%s242] sm:$0xff]
        %v248 = vld [vmem:[%s246] sm:$0xff]
        %v249 = vld [vmem:[%s206] sm:$0xff]
        %v250 = vld [vmem:[%s3] sm:$0xff]
        %v251 = vld [vmem:[%s3 + $0x8] sm:$0xff]
        %v252 = vld [vmem:[%s3 + $0x10] sm:$0xff]
        %v253 = vld [vmem:[%s3 + $0x18] sm:$0xff]
        %v254 = vld [vmem:[%s3 + $0x20] sm:$0xff]
        %v255 = vld [vmem:[%s3 + $0x28] sm:$0x1]
        %vm256 = vcmask 130048
        %v258 = vsel %vm256, %v249, 0
        %260 = vmatprep.subr.mxu0 0.0
        %261 = vmatpush1.msra.mxu0 0.0
        %262 = vmatprep.subr.mxu0 0.0
        %263 = vmatpush1.msra.mxu0 0.0
        %264 = vmatprep.subr.mxu0 0.0
        %265 = vmatpush1.msra.mxu0 0.0
        %266 = vmatprep.subr.mxu0 0.0
        %267 = vmatpush1.msra.mxu0 0.0
        %268 = vmatprep.subr.mxu0 0.0
        %269 = vmatpush1.msra.mxu0 0.0
        %270 = vmatprep.subr.mxu0 0.0
        %271 = vmatpush1.msra.mxu0 0.0
        %272 = vmatprep.subr.mxu0 0.0
        %273 = vmatpush1.msra.mxu0 0.0
        %274 = vmatprep.subr.mxu0 0.0
        %275 = vmatpush1.msra.mxu0 0.0
        %276 = vmatprep.subr.mxu0 0.0
        %277 = vmatpush1.msra.mxu0 0.0
        %278 = vmatprep.subr.mxu0 0.0
        %279 = vmatpush1.msra.mxu0 0.0
        %280 = vmatprep.subr.mxu0 0.0
        %281 = vmatpush1.msra.mxu0 0.0
        %282 = vmatprep.subr.mxu0 0.0
        %283 = vmatpush1.msra.mxu0 0.0
        %284 = vmatprep.subr.mxu0 0.0
        %285 = vmatpush1.msra.mxu0 0.0
        %286 = vmatprep.subr.mxu0 0.0
        %287 = vmatpush1.msra.mxu0 0.0
        %288 = vmatprep.subr.mxu0 0.0
        %289 = vmatpush1.msra.mxu0 %v254
        %290 = vmatprep.subr.mxu0 0.0
        %291 = vmatpush1.msra.mxu0 %v253
        %292 = vmatprep.subr.mxu0 0.0
        %293 = vmatpush2.msra.mxu0 0.0
        %294 = vmatprep.subr.mxu0 0.0
        %295 = vmatpush2.msra.mxu0 0.0
        %296 = vmatprep.subr.mxu0 0.0
        %297 = vmatpush2.msra.mxu0 0.0
        %298 = vmatprep.subr.mxu0 0.0
        %299 = vmatpush2.msra.mxu0 0.0
        %300 = vmatprep.subr.mxu0 0.0
        %301 = vmatpush2.msra.mxu0 0.0
        %302 = vmatprep.subr.mxu0 0.0
        %303 = vmatpush2.msra.mxu0 0.0
        %304 = vmatprep.subr.mxu0 0.0
        %305 = vmatpush2.msra.mxu0 0.0
        %306 = vmatprep.subr.mxu0 0.0
        %307 = vmatpush2.msra.mxu0 0.0
        %308 = vmatprep.subr.mxu0 0.0
        %309 = vmatpush2.msra.mxu0 0.0
        %310 = vmatprep.subr.mxu0 0.0
        %311 = vmatpush2.msra.mxu0 0.0
        %312 = vmatprep.subr.mxu0 0.0
        %313 = vmatpush2.msra.mxu0 0.0
        %314 = vmatprep.subr.mxu0 0.0
        %315 = vmatpush2.msra.mxu0 0.0
        %316 = vmatprep.subr.mxu0 0.0
        %317 = vmatpush2.msra.mxu0 0.0
        %318 = vmatprep.subr.mxu0 0.0
        %319 = vmatpush2.msra.mxu0 0.0
        %320 = vmatprep.subr.mxu0 0.0
        %321 = vmatpush2.msra.mxu0 0.0
        %322 = vmatprep.subr.mxu0 0.0
        %323 = vmatpush2.msra.mxu0 0.0
        %324 = vmatprep.mubr.f32.mxu0 0.0
        %325 = vmatmul.mubr.f32.gmra.mxu0 %v258
        %v326 = vpop.f32.mrf.mxu0
        %v327 = vadd.f32 0.0, %v326
        %v328 = vpop.f32.mrf.mxu0
        %329 = vdwg.mxu0
        %vm330 = vcmask 195584
        %v332 = vsel %vm330, %v248, 0
        %334 = vmatprep.subr.mxu0 0.0
        %335 = vmatpush1.msra.mxu0 0.0
        %336 = vmatprep.subr.mxu0 0.0
        %337 = vmatpush1.msra.mxu0 0.0
        %338 = vmatprep.subr.mxu0 0.0
        %339 = vmatpush1.msra.mxu0 0.0
        %340 = vmatprep.subr.mxu0 0.0
        %341 = vmatpush1.msra.mxu0 0.0
        %342 = vmatprep.subr.mxu0 0.0
        %343 = vmatpush1.msra.mxu0 0.0
        %344 = vmatprep.subr.mxu0 0.0
        %345 = vmatpush1.msra.mxu0 0.0
        %346 = vmatprep.subr.mxu0 0.0
        %347 = vmatpush1.msra.mxu0 0.0
        %348 = vmatprep.subr.mxu0 0.0
        %349 = vmatpush1.msra.mxu0 0.0
        %350 = vmatprep.subr.mxu0 0.0
        %351 = vmatpush1.msra.mxu0 0.0
        %352 = vmatprep.subr.mxu0 0.0
        %353 = vmatpush1.msra.mxu0 0.0
        %354 = vmatprep.subr.mxu0 0.0
        %355 = vmatpush1.msra.mxu0 0.0
        %356 = vmatprep.subr.mxu0 0.0
        %357 = vmatpush1.msra.mxu0 0.0
        %358 = vmatprep.subr.mxu0 0.0
        %359 = vmatpush1.msra.mxu0 0.0
        %360 = vmatprep.subr.mxu0 0.0
        %361 = vmatpush1.msra.mxu0 %v252
        %362 = vmatprep.subr.mxu0 0.0
        %363 = vmatpush1.msra.mxu0 %v251
        %364 = vmatprep.subr.mxu0 0.0
        %365 = vmatpush1.msra.mxu0 %v250
        %366 = vmatprep.subr.mxu0 0.0
        %367 = vmatpush2.msra.mxu0 0.0
        %368 = vmatprep.subr.mxu0 0.0
        %369 = vmatpush2.msra.mxu0 0.0
        %370 = vmatprep.subr.mxu0 0.0
        %371 = vmatpush2.msra.mxu0 0.0
        %372 = vmatprep.subr.mxu0 0.0
        %373 = vmatpush2.msra.mxu0 0.0
        %374 = vmatprep.subr.mxu0 0.0
        %375 = vmatpush2.msra.mxu0 0.0
        %376 = vmatprep.subr.mxu0 0.0
        %377 = vmatpush2.msra.mxu0 0.0
        %378 = vmatprep.subr.mxu0 0.0
        %379 = vmatpush2.msra.mxu0 0.0
        %380 = vmatprep.subr.mxu0 0.0
        %381 = vmatpush2.msra.mxu0 0.0
        %382 = vmatprep.subr.mxu0 0.0
        %383 = vmatpush2.msra.mxu0 0.0
        %384 = vmatprep.subr.mxu0 0.0
        %385 = vmatpush2.msra.mxu0 0.0
        %386 = vmatprep.subr.mxu0 0.0
        %387 = vmatpush2.msra.mxu0 0.0
        %388 = vmatprep.subr.mxu0 0.0
        %389 = vmatpush2.msra.mxu0 0.0
        %390 = vmatprep.subr.mxu0 0.0
        %391 = vmatpush2.msra.mxu0 0.0
        %392 = vmatprep.subr.mxu0 0.0
        %393 = vmatpush2.msra.mxu0 0.0
        %394 = vmatprep.subr.mxu0 0.0
        %395 = vmatpush2.msra.mxu0 0.0
        %396 = vmatprep.subr.mxu0 0.0
        %397 = vmatpush2.msra.mxu0 0.0
        %398 = vmatprep.mubr.f32.mxu0 0.0
        %399 = vmatmul.mubr.f32.gmra.mxu0 %v332
        %v400 = vpop.f32.mrf.mxu0
        %v401 = vadd.f32 %v327, %v400
        %v402 = vpop.f32.mrf.mxu0
        %403 = vdwg.mxu0
        %405 = vset.pattern.permute.xlu0 0
        %406 = vperm.xlu0 %405, %v247
        %v407 = vpop.permute.xlu0 %406
        %v409 = vlaneseq
        %v410 = vshrl.u32 %v409, 7
        %v411 = vsub.s32 0, %v410
        %v412 = vrot.slane %v255, %v411
        %v413 = vmul.f32 %v407, %v412
        %v414 = vadd.f32 %v401, %v413
        %v415 = vld [vmem:[%s3 + $0xf0] sm:$0x1]
        %v416 = vld [vmem:[%s3 + $0xf1] sm:$0x1]
        %vm417 = vcmask 523264
        %v418 = vsel %vm417, %v414, 0.0
        %v419 = vrot.slane %v418, 4
        %v420 = vadd.f32 %v418, %v419
        %v421 = vrot.slane %v420, 2
        %v422 = vadd.f32 %v420, %v421
        %v423 = vrot.slane %v422, 1
        %v424 = vadd.f32 %v422, %v423
        %v425 = vrcp.pop 8.0
        %v426 = vmul.f32 %v424, %v425
        %v427 = vsub.f32 %v414, %v426
        %v428 = vmul.f32 %v427, %v427
        %v429 = vsel %vm417, %v428, 0.0
        %v430 = vrot.slane %v429, 4
        %v431 = vadd.f32 %v429, %v430
        %v432 = vrot.slane %v431, 2
        %v433 = vadd.f32 %v431, %v432
        %v434 = vrot.slane %v433, 1
        %v435 = vadd.f32 %v433, %v434
        %v436 = vmul.f32 %v435, %v425
        %v437 = vadd.f32 %v436, 1e-05
        %v438 = vrsqrt.pop %v437
        %v439 = vmul.f32 %v415, %v438
        %v440 = vmul.f32 %v426, %v439
        %v441 = vsub.f32 %v416, %v440
        %v442 = vlaneseq
        %v443 = vshrl.u32 %v442, 7
        %v444 = vsub.s32 0, %v443
        %v445 = vrot.slane %v439, %v444
        %v446 = vmul.f32 %v414, %v445
        %v447 = vlaneseq
        %v448 = vshrl.u32 %v447, 7
        %v449 = vsub.s32 0, %v448
        %v450 = vrot.slane %v441, %v449
        %v451 = vadd.f32 %v446, %v450
        %v452 = vmul.f32 %v451, 0.01
        %v453 = vmax.f32 %v451, %v452
        %v454 = vld [vmem:[%s3 + $0x30] sm:$0xff]
        %v455 = vld [vmem:[%s3 + $0x38] sm:$0xff]
        %v456 = vld [vmem:[%s3 + $0x40] sm:$0xff]
        %v457 = vld [vmem:[%s3 + $0x48] sm:$0xff]
        %v458 = vld [vmem:[%s3 + $0x50] sm:$0xff]
        %v459 = vld [vmem:[%s3 + $0x58] sm:$0xff]
        %v460 = vld [vmem:[%s3 + $0x60] sm:$0xff]
        %v461 = vld [vmem:[%s3 + $0x68] sm:$0xff]
        %v463 = vsel %vm417, %v453, 0
        %465 = vmatprep.subr.mxu0 0.0
        %466 = vmatpush1.msra.mxu0 0.0
        %467 = vmatprep.subr.mxu0 0.0
        %468 = vmatpush1.msra.mxu0 0.0
        %469 = vmatprep.subr.mxu0 0.0
        %470 = vmatpush1.msra.mxu0 0.0
        %471 = vmatprep.subr.mxu0 0.0
        %472 = vmatpush1.msra.mxu0 0.0
        %473 = vmatprep.subr.mxu0 0.0
        %474 = vmatpush1.msra.mxu0 0.0
        %475 = vmatprep.subr.mxu0 0.0
        %476 = vmatpush1.msra.mxu0 0.0
        %477 = vmatprep.subr.mxu0 0.0
        %478 = vmatpush1.msra.mxu0 0.0
        %479 = vmatprep.subr.mxu0 0.0
        %480 = vmatpush1.msra.mxu0 0.0
        %481 = vmatprep.subr.mxu0 0.0
        %482 = vmatpush1.msra.mxu0 %v461
        %483 = vmatprep.subr.mxu0 0.0
        %484 = vmatpush1.msra.mxu0 %v460
        %485 = vmatprep.subr.mxu0 0.0
        %486 = vmatpush1.msra.mxu0 %v459
        %487 = vmatprep.subr.mxu0 0.0
        %488 = vmatpush1.msra.mxu0 %v458
        %489 = vmatprep.subr.mxu0 0.0
        %490 = vmatpush1.msra.mxu0 %v457
        %491 = vmatprep.subr.mxu0 0.0
        %492 = vmatpush1.msra.mxu0 %v456
        %493 = vmatprep.subr.mxu0 0.0
        %494 = vmatpush1.msra.mxu0 %v455
        %495 = vmatprep.subr.mxu0 0.0
        %496 = vmatpush1.msra.mxu0 %v454
        %497 = vmatprep.subr.mxu0 0.0
        %498 = vmatpush2.msra.mxu0 0.0
        %499 = vmatprep.subr.mxu0 0.0
        %500 = vmatpush2.msra.mxu0 0.0
        %501 = vmatprep.subr.mxu0 0.0
        %502 = vmatpush2.msra.mxu0 0.0
        %503 = vmatprep.subr.mxu0 0.0
        %504 = vmatpush2.msra.mxu0 0.0
        %505 = vmatprep.subr.mxu0 0.0
        %506 = vmatpush2.msra.mxu0 0.0
        %507 = vmatprep.subr.mxu0 0.0
        %508 = vmatpush2.msra.mxu0 0.0
        %509 = vmatprep.subr.mxu0 0.0
        %510 = vmatpush2.msra.mxu0 0.0
        %511 = vmatprep.subr.mxu0 0.0
        %512 = vmatpush2.msra.mxu0 0.0
        %513 = vmatprep.subr.mxu0 0.0
        %514 = vmatpush2.msra.mxu0 0.0
        %515 = vmatprep.subr.mxu0 0.0
        %516 = vmatpush2.msra.mxu0 0.0
        %517 = vmatprep.subr.mxu0 0.0
        %518 = vmatpush2.msra.mxu0 0.0
        %519 = vmatprep.subr.mxu0 0.0
        %520 = vmatpush2.msra.mxu0 0.0
        %521 = vmatprep.subr.mxu0 0.0
        %522 = vmatpush2.msra.mxu0 0.0
        %523 = vmatprep.subr.mxu0 0.0
        %524 = vmatpush2.msra.mxu0 0.0
        %525 = vmatprep.subr.mxu0 0.0
        %526 = vmatpush2.msra.mxu0 0.0
        %527 = vmatprep.subr.mxu0 0.0
        %528 = vmatpush2.msra.mxu0 0.0
        %529 = vmatprep.mubr.f32.mxu0 0.0
        %530 = vmatmul.mubr.f32.gmra.mxu0 %v463
        %v531 = vpop.f32.mrf.mxu0
        %v532 = vadd.f32 0.0, %v531
        %v533 = vpop.f32.mrf.mxu0
        %534 = vdwg.mxu0
        %v535 = vld [vmem:[%s3 + $0xf2] sm:$0x1]
        %v536 = vld [vmem:[%s3 + $0xf3] sm:$0x1]
        %v537 = vsel %vm417, %v532, 0.0
        %v538 = vrot.slane %v537, 4
        %v539 = vadd.f32 %v537, %v538
        %v540 = vrot.slane %v539, 2
        %v541 = vadd.f32 %v539, %v540
        %v542 = vrot.slane %v541, 1
        %v543 = vadd.f32 %v541, %v542
        %v544 = vmul.f32 %v543, %v425
        %v545 = vsub.f32 %v532, %v544
        %v546 = vmul.f32 %v545, %v545
        %v547 = vsel %vm417, %v546, 0.0
        %v548 = vrot.slane %v547, 4
        %v549 = vadd.f32 %v547, %v548
        %v550 = vrot.slane %v549, 2
        %v551 = vadd.f32 %v549, %v550
        %v552 = vrot.slane %v551, 1
        %v553 = vadd.f32 %v551, %v552
        %v554 = vmul.f32 %v553, %v425
        %v555 = vadd.f32 %v554, 1e-05
        %v556 = vrsqrt.pop %v555
        %v557 = vmul.f32 %v535, %v556
        %v558 = vmul.f32 %v544, %v557
        %v559 = vsub.f32 %v536, %v558
        %v560 = vlaneseq
        %v561 = vshrl.u32 %v560, 7
        %v562 = vsub.s32 0, %v561
        %v563 = vrot.slane %v557, %v562
        %v564 = vmul.f32 %v532, %v563
        %v565 = vlaneseq
        %v566 = vshrl.u32 %v565, 7
        %v567 = vsub.s32 0, %v566
        %v568 = vrot.slane %v559, %v567
        %v569 = vadd.f32 %v564, %v568
        %v570 = vmul.f32 %v569, 0.01
        %v571 = vmax.f32 %v569, %v570
        %v572 = vld [vmem:[%s3 + $0x70] sm:$0xff]
        %v573 = vld [vmem:[%s3 + $0x78] sm:$0xff]
        %v574 = vld [vmem:[%s3 + $0x80] sm:$0xff]
        %v575 = vld [vmem:[%s3 + $0x88] sm:$0xff]
        %v576 = vld [vmem:[%s3 + $0x90] sm:$0xff]
        %v577 = vld [vmem:[%s3 + $0x98] sm:$0xff]
        %v578 = vld [vmem:[%s3 + $0xa0] sm:$0xff]
        %v579 = vld [vmem:[%s3 + $0xa8] sm:$0xff]
        %v581 = vsel %vm417, %v571, 0
        %583 = vmatprep.subr.mxu0 0.0
        %584 = vmatpush1.msra.mxu0 0.0
        %585 = vmatprep.subr.mxu0 0.0
        %586 = vmatpush1.msra.mxu0 0.0
        %587 = vmatprep.subr.mxu0 0.0
        %588 = vmatpush1.msra.mxu0 0.0
        %589 = vmatprep.subr.mxu0 0.0
        %590 = vmatpush1.msra.mxu0 0.0
        %591 = vmatprep.subr.mxu0 0.0
        %592 = vmatpush1.msra.mxu0 0.0
        %593 = vmatprep.subr.mxu0 0.0
        %594 = vmatpush1.msra.mxu0 0.0
        %595 = vmatprep.subr.mxu0 0.0
        %596 = vmatpush1.msra.mxu0 0.0
        %597 = vmatprep.subr.mxu0 0.0
        %598 = vmatpush1.msra.mxu0 0.0
        %599 = vmatprep.subr.mxu0 0.0
        %600 = vmatpush1.msra.mxu0 %v579
        %601 = vmatprep.subr.mxu0 0.0
        %602 = vmatpush1.msra.mxu0 %v578
        %603 = vmatprep.subr.mxu0 0.0
        %604 = vmatpush1.msra.mxu0 %v577
        %605 = vmatprep.subr.mxu0 0.0
        %606 = vmatpush1.msra.mxu0 %v576
        %607 = vmatprep.subr.mxu0 0.0
        %608 = vmatpush1.msra.mxu0 %v575
        %609 = vmatprep.subr.mxu0 0.0
        %610 = vmatpush1.msra.mxu0 %v574
        %611 = vmatprep.subr.mxu0 0.0
        %612 = vmatpush1.msra.mxu0 %v573
        %613 = vmatprep.subr.mxu0 0.0
        %614 = vmatpush1.msra.mxu0 %v572
        %615 = vmatprep.subr.mxu0 0.0
        %616 = vmatpush2.msra.mxu0 0.0
        %617 = vmatprep.subr.mxu0 0.0
        %618 = vmatpush2.msra.mxu0 0.0
        %619 = vmatprep.subr.mxu0 0.0
        %620 = vmatpush2.msra.mxu0 0.0
        %621 = vmatprep.subr.mxu0 0.0
        %622 = vmatpush2.msra.mxu0 0.0
        %623 = vmatprep.subr.mxu0 0.0
        %624 = vmatpush2.msra.mxu0 0.0
        %625 = vmatprep.subr.mxu0 0.0
        %626 = vmatpush2.msra.mxu0 0.0
        %627 = vmatprep.subr.mxu0 0.0
        %628 = vmatpush2.msra.mxu0 0.0
        %629 = vmatprep.subr.mxu0 0.0
        %630 = vmatpush2.msra.mxu0 0.0
        %631 = vmatprep.subr.mxu0 0.0
        %632 = vmatpush2.msra.mxu0 0.0
        %633 = vmatprep.subr.mxu0 0.0
        %634 = vmatpush2.msra.mxu0 0.0
        %635 = vmatprep.subr.mxu0 0.0
        %636 = vmatpush2.msra.mxu0 0.0
        %637 = vmatprep.subr.mxu0 0.0
        %638 = vmatpush2.msra.mxu0 0.0
        %639 = vmatprep.subr.mxu0 0.0
        %640 = vmatpush2.msra.mxu0 0.0
        %641 = vmatprep.subr.mxu0 0.0
        %642 = vmatpush2.msra.mxu0 0.0
        %643 = vmatprep.subr.mxu0 0.0
        %644 = vmatpush2.msra.mxu0 0.0
        %645 = vmatprep.subr.mxu0 0.0
        %646 = vmatpush2.msra.mxu0 0.0
        %647 = vmatprep.mubr.f32.mxu0 0.0
        %648 = vmatmul.mubr.f32.gmra.mxu0 %v581
        %v649 = vpop.f32.mrf.mxu0
        %v650 = vadd.f32 0.0, %v649
        %v651 = vpop.f32.mrf.mxu0
        %652 = vdwg.mxu0
        %v653 = vld [vmem:[%s3 + $0xf4] sm:$0x1]
        %v654 = vld [vmem:[%s3 + $0xf5] sm:$0x1]
        %v655 = vsel %vm417, %v650, 0.0
        %v656 = vrot.slane %v655, 4
        %v657 = vadd.f32 %v655, %v656
        %v658 = vrot.slane %v657, 2
        %v659 = vadd.f32 %v657, %v658
        %v660 = vrot.slane %v659, 1
        %v661 = vadd.f32 %v659, %v660
        %v662 = vmul.f32 %v661, %v425
        %v663 = vsub.f32 %v650, %v662
        %v664 = vmul.f32 %v663, %v663
        %v665 = vsel %vm417, %v664, 0.0
        %v666 = vrot.slane %v665, 4
        %v667 = vadd.f32 %v665, %v666
        %v668 = vrot.slane %v667, 2
        %v669 = vadd.f32 %v667, %v668
        %v670 = vrot.slane %v669, 1
        %v671 = vadd.f32 %v669, %v670
        %v672 = vmul.f32 %v671, %v425
        %v673 = vadd.f32 %v672, 1e-05
        %v674 = vrsqrt.pop %v673
        %v675 = vmul.f32 %v653, %v674
        %v676 = vmul.f32 %v662, %v675
        %v677 = vsub.f32 %v654, %v676
        %v678 = vlaneseq
        %v679 = vshrl.u32 %v678, 7
        %v680 = vsub.s32 0, %v679
        %v681 = vrot.slane %v675, %v680
        %v682 = vmul.f32 %v650, %v681
        %v683 = vlaneseq
        %v684 = vshrl.u32 %v683, 7
        %v685 = vsub.s32 0, %v684
        %v686 = vrot.slane %v677, %v685
        %v687 = vadd.f32 %v682, %v686
        %v688 = vmul.f32 %v687, 0.01
        %v689 = vmax.f32 %v687, %v688
        %v690 = vld [vmem:[%s3 + $0xb0] sm:$0xff]
        %v691 = vld [vmem:[%s3 + $0xb8] sm:$0xff]
        %v692 = vld [vmem:[%s3 + $0xc0] sm:$0xff]
        %v693 = vld [vmem:[%s3 + $0xc8] sm:$0xff]
        %v694 = vld [vmem:[%s3 + $0xd0] sm:$0xff]
        %v695 = vld [vmem:[%s3 + $0xd8] sm:$0xff]
        %v696 = vld [vmem:[%s3 + $0xe0] sm:$0xff]
        %v697 = vld [vmem:[%s3 + $0xe8] sm:$0xff]
        %v698 = vld [vmem:[%s3 + $0xf6] sm:$0x1]
        %v699 = vlaneseq
        %v700 = vshrl.u32 %v699, 7
        %v701 = vsub.s32 0, %v700
        %v702 = vrot.slane %v698, %v701
        %v704 = vsel %vm417, %v689, 0
        %706 = vmatprep.subr.mxu0 0.0
        %707 = vmatpush1.msra.mxu0 0.0
        %708 = vmatprep.subr.mxu0 0.0
        %709 = vmatpush1.msra.mxu0 0.0
        %710 = vmatprep.subr.mxu0 0.0
        %711 = vmatpush1.msra.mxu0 0.0
        %712 = vmatprep.subr.mxu0 0.0
        %713 = vmatpush1.msra.mxu0 0.0
        %714 = vmatprep.subr.mxu0 0.0
        %715 = vmatpush1.msra.mxu0 0.0
        %716 = vmatprep.subr.mxu0 0.0
        %717 = vmatpush1.msra.mxu0 0.0
        %718 = vmatprep.subr.mxu0 0.0
        %719 = vmatpush1.msra.mxu0 0.0
        %720 = vmatprep.subr.mxu0 0.0
        %721 = vmatpush1.msra.mxu0 0.0
        %722 = vmatprep.subr.mxu0 0.0
        %723 = vmatpush1.msra.mxu0 %v697
        %724 = vmatprep.subr.mxu0 0.0
        %725 = vmatpush1.msra.mxu0 %v696
        %726 = vmatprep.subr.mxu0 0.0
        %727 = vmatpush1.msra.mxu0 %v695
        %728 = vmatprep.subr.mxu0 0.0
        %729 = vmatpush1.msra.mxu0 %v694
        %730 = vmatprep.subr.mxu0 0.0
        %731 = vmatpush1.msra.mxu0 %v693
        %732 = vmatprep.subr.mxu0 0.0
        %733 = vmatpush1.msra.mxu0 %v692
        %734 = vmatprep.subr.mxu0 0.0
        %735 = vmatpush1.msra.mxu0 %v691
        %736 = vmatprep.subr.mxu0 0.0
        %737 = vmatpush1.msra.mxu0 %v690
        %738 = vmatprep.subr.mxu0 0.0
        %739 = vmatpush2.msra.mxu0 0.0
        %740 = vmatprep.subr.mxu0 0.0
        %741 = vmatpush2.msra.mxu0 0.0
        %742 = vmatprep.subr.mxu0 0.0
        %743 = vmatpush2.msra.mxu0 0.0
        %744 = vmatprep.subr.mxu0 0.0
        %745 = vmatpush2.msra.mxu0 0.0
        %746 = vmatprep.subr.mxu0 0.0
        %747 = vmatpush2.msra.mxu0 0.0
        %748 = vmatprep.subr.mxu0 0.0
        %749 = vmatpush2.msra.mxu0 0.0
        %750 = vmatprep.subr.mxu0 0.0
        %751 = vmatpush2.msra.mxu0 0.0
        %752 = vmatprep.subr.mxu0 0.0
        %753 = vmatpush2.msra.mxu0 0.0
        %754 = vmatprep.subr.mxu0 0.0
        %755 = vmatpush2.msra.mxu0 0.0
        %756 = vmatprep.subr.mxu0 0.0
        %757 = vmatpush2.msra.mxu0 0.0
        %758 = vmatprep.subr.mxu0 0.0
        %759 = vmatpush2.msra.mxu0 0.0
        %760 = vmatprep.subr.mxu0 0.0
        %761 = vmatpush2.msra.mxu0 0.0
        %762 = vmatprep.subr.mxu0 0.0
        %763 = vmatpush2.msra.mxu0 0.0
        %764 = vmatprep.subr.mxu0 0.0
        %765 = vmatpush2.msra.mxu0 0.0
        %766 = vmatprep.subr.mxu0 0.0
        %767 = vmatpush2.msra.mxu0 0.0
        %768 = vmatprep.subr.mxu0 0.0
        %769 = vmatpush2.msra.mxu0 0.0
        %770 = vmatprep.mubr.f32.mxu0 0.0
        %771 = vmatmul.mubr.f32.gmra.mxu0 %v704
        %v772 = vpop.f32.mrf.mxu0
        %v773 = vadd.f32 %v702, %v772
        %v774 = vpop.f32.mrf.mxu0
        %775 = vdwg.mxu0
        %v776 = vadd.f32 %v249, %v773
        %v777 = vmax.f32 %v776, 0.0
        %v778 = vmin.f32 %v777, 1.0
        %779 = vst.msk [vmem:[%s238] sm:$0xff] %vm256, %v778
        %s780 = sand.u32 %s128, 1
        %s781 = scalar_lea.sflag [#allocation4], %s780
        %s782 = sand.u32 %s128, 1
        %s783 = smul.addr %s782, 8
        %s784 = scalar_lea.vmem [#allocation5], %s783
        // Predicated region
        $region41: #{tpu_custom_call.1} parent=35 // pred_check
          %p785 = pneg %p138
        $region42: #{tpu_custom_call.1} parent=35 // pred_check_branch
          %787 = sbr.rel (%p785) target = $region44
        $region43: #{tpu_custom_call.1} parent=35 // pred_region
          %s789 = ssub.s32 128, 128
          %790 = vsyncadd %s781, %s789
          %s791 = smul.addr %s21, 128
          %s792 = scalar_lea.hbm %s4, %s791
          %s794 = sshll.u32 %s784, 4
          %s795 = int_to_ptr.vmem [resolvable:$true] %s794
          %797 = dma.vmem_to_hbm [thread:$0]  %s795, 128, %s792, %s781
        $region44: #{tpu_custom_call.1} parent=35 // pred_fallthru
          _
      $region36: #{tpu_custom_call.1} parent=5 // pred_fallthru
        _
      %p798 = scmp.le.s32.totalorder 2, %s16
      // Predicated region
      $region45: #{tpu_custom_call.1} parent=5 // pred_check
        %p799 = pneg %p798
      $region46: #{tpu_custom_call.1} parent=5 // pred_check_branch
        %801 = sbr.rel (%p799) target = $region48
      $region47: #{tpu_custom_call.1} parent=5 // pred_region
        %s802 = ssub.s32 %s16, 2
        // Predicated region
        $region49: #{tpu_custom_call.1} parent=47 // pred_check
          %p803 = pneg %p144
        $region50: #{tpu_custom_call.1} parent=47 // pred_check_branch
          %805 = sbr.rel (%p803) target = $region52
        $region51: #{tpu_custom_call.1} parent=47 // pred_region
          %s806 = sand.u32 %s129, 1
          %s807 = scalar_lea.sflag [#allocation4], %s806
          %s808 = sand.u32 %s129, 1
          %s809 = smul.addr %s808, 8
          %s810 = scalar_lea.vmem [#allocation5], %s809
          %811 = dma.done %s807, 128
        $region52: #{tpu_custom_call.1} parent=47 // pred_fallthru
          _
      $region48: #{tpu_custom_call.1} parent=5 // pred_fallthru
        _
    $region6: #{tpu_custom_call.1} parent=1 // loop_footer
      %s20 = sadd.s32 1, %s16
    $region7: #{tpu_custom_call.1} parent=1 // loop_footer_branch
      %15 = sbr.rel target = $region3
    $region8: #{tpu_custom_call.1} parent=1 // loop_exit
      _
    %812 = vsyncpa [#allocation3], 1
    %s813 = scalar_lea.sflag [#allocation3], 1
    %814 = vsyncpa %s813, 1
    %815 = vsyncpa [#allocation4], 1
    %s816 = scalar_lea.sflag [#allocation4], 1
    %817 = vsyncpa %s816, 1

</llo_original>
